<compile_context>
chip_gen: v7x
topology: tpu7x:2x2x1
jax: 0.10.0
libtpu: 0.0.40
codegen_flags: <defaults>
</compile_context>

<pallas_src>
import jax
import jax.numpy as jnp
from jax.experimental import pallas as pl
from jax.experimental.pallas import tpu as pltpu

_LANE = 128


def _round_up(x, m):
    return (x + m - 1) // m * m


def _conv_linear_kernel_single_k(x_ref, w_ref, b_ref, o_ref):
    # x_ref: (tile_m, Kp)  w_ref: (Kp, tile_n)  b_ref: (1, tile_n) fp32
    # o_ref: (tile_m, tile_n)
    acc = jnp.dot(x_ref[...], w_ref[...], preferred_element_type=jnp.float32)
    o_ref[...] = (acc + b_ref[...]).astype(o_ref.dtype)


def _conv_linear_kernel_tiled_k(x_ref, w_ref, b_ref, o_ref, acc_ref):
    # Same as above but K is a (last, "arbitrary") grid axis with an fp32
    # accumulator resident across it.
    k = pl.program_id(2)

    @pl.when(k == 0)
    def _():
        acc_ref[...] = jnp.zeros_like(acc_ref)

    acc_ref[...] += jnp.dot(x_ref[...], w_ref[...],
                            preferred_element_type=jnp.float32)

    @pl.when(k == pl.num_programs(2) - 1)
    def _():
        o_ref[...] = (acc_ref[...] + b_ref[...]).astype(o_ref.dtype)


def conv_linear(x, weight, bias=None, *, channel_last=True, compute_dtype=None,
                tile_m=512, tile_n=512, tile_k=2048,
                vmem_budget_bytes=40 * 1024 * 1024):
    """Equivalent to ConvLinear(in, out, bias, channel_last).forward.

    channel_last=True : x is (B, S, K), returns (B, S, N)
    channel_last=False: x is (B, K, S), returns (B, N, S)
    weight: (N, K)  (PyTorch Conv1d weight with the kernel_size=1 dim squeezed)
    bias:   (N,) or None

    compute_dtype: dtype the matmul operands are cast to (e.g. jnp.bfloat16 to
    hit MXU bf16 rates on v6e/v7x). Accumulation is always fp32.
    """
    assert x.ndim == 3, (
        "Expected input to be (batch, seq_len, in_features) or "
        "(batch, in_features, seq_len)")
    if not channel_last:
        x = jnp.swapaxes(x, 1, 2)  # -> (B, S, K)

    B, S, K = x.shape
    N, Kw = weight.shape
    assert Kw == K
    if bias is None:
        bias = jnp.zeros((N,), jnp.float32)

    out_dtype = x.dtype
    if compute_dtype is None:
        compute_dtype = x.dtype
    in_itemsize = jnp.dtype(compute_dtype).itemsize
    out_itemsize = jnp.dtype(out_dtype).itemsize
    # Sublane granularity: 8 rows for 4-byte dtypes, 16 for 2-byte (bf16).
    sublane = 8 * (4 // in_itemsize)

    M = B * S
    # Pad contraction (K) and output-feature (N) dims to full 128-lane widths:
    # keeps the MXU fed and the output stores unmasked (lane-dense).
    Kp = _round_up(K, _LANE)
    Np = _round_up(N, _LANE)

    # Tile selection: cap requested tiles at the (padded) problem size, then
    # shrink until the double-buffered working set fits a budget that is safe
    # on v7x (64 MiB VMEM per TensorCore) as well as v5e/v6e (128 MiB).
    tile_m = min(_round_up(tile_m, sublane), _round_up(M, sublane))
    tile_n = min(_round_up(tile_n, _LANE), Np)
    tile_k = min(_round_up(tile_k, _LANE), Kp)

    def vmem_bytes(tm, tn, tk):
        tiled_k = tk < Kp
        return (2 * tm * tk * in_itemsize       # x tile, double-buffered
                + 2 * tk * tn * in_itemsize     # weight tile
                + 2 * tn * 4                    # bias tile (fp32)
                + 2 * tm * tn * out_itemsize    # output tile
                + (tm * tn * 4 if tiled_k else 0))  # fp32 accumulator scratch

    while vmem_bytes(tile_m, tile_n, tile_k) > vmem_budget_bytes and tile_m > sublane:
        tile_m = max(sublane, tile_m // 2)
    while vmem_bytes(tile_m, tile_n, tile_k) > vmem_budget_bytes and tile_n > _LANE:
        tile_n = max(_LANE, tile_n // 2)
    while vmem_bytes(tile_m, tile_n, tile_k) > vmem_budget_bytes and tile_k > _LANE:
        tile_k = max(_LANE, tile_k // 2)

    assert tile_m % sublane == 0
    assert tile_n % _LANE == 0
    assert tile_k % _LANE == 0

    Mp = _round_up(M, tile_m)
    Np = _round_up(Np, tile_n)
    Kp = _round_up(Kp, tile_k)
    grid_m = Mp // tile_m
    grid_n = Np // tile_n
    grid_k = Kp // tile_k

    # Zero-padded operands: padded K lanes contribute exactly 0 to the dot;
    # padded M rows / N columns are sliced off below.
    x2d = x.reshape(M, K).astype(compute_dtype)
    if (Mp, Kp) != (M, K):
        x2d = jnp.pad(x2d, ((0, Mp - M), (0, Kp - K)))
    w = weight.T.astype(compute_dtype)
    if (Kp, Np) != (K, N):
        w = jnp.pad(w, ((0, Kp - K), (0, Np - N)))
    b2d = bias.astype(jnp.float32)
    if Np != N:
        b2d = jnp.pad(b2d, (0, Np - N))
    b2d = b2d.reshape(1, Np)

    cost = pl.CostEstimate(
        flops=2 * M * K * N,
        transcendentals=0,
        bytes_accessed=(M * K * in_itemsize + K * N * in_itemsize
                        + N * 4 + M * N * out_itemsize),
    )

    if grid_k == 1:
        # Common case for kernel_size=1 conv: K resident, no reduction loop,
        # no accumulator scratch.
        grid_spec = pltpu.PrefetchScalarGridSpec(
            num_scalar_prefetch=0,
            grid=(grid_m, grid_n),
            in_specs=[
                # X tile streamed along M; constant block index across the
                # inner N axis, so it is not re-DMA'd per j step.
                pl.BlockSpec((tile_m, Kp), lambda i, j: (i, 0)),
                # Weight tile along N.
                pl.BlockSpec((Kp, tile_n), lambda i, j: (0, j)),
                # Bias tile along N (fp32, added after the fp32 accumulate).
                pl.BlockSpec((1, tile_n), lambda i, j: (0, j)),
            ],
            out_specs=pl.BlockSpec((tile_m, tile_n), lambda i, j: (i, j)),
        )
        kernel = _conv_linear_kernel_single_k
        semantics = ("parallel", "parallel")
    else:
        # Large-K fallback: K is the last ("arbitrary") grid axis with an
        # fp32 accumulator resident across it.
        grid_spec = pltpu.PrefetchScalarGridSpec(
            num_scalar_prefetch=0,
            grid=(grid_m, grid_n, grid_k),
            in_specs=[
                pl.BlockSpec((tile_m, tile_k), lambda i, j, k: (i, k)),
                pl.BlockSpec((tile_k, tile_n), lambda i, j, k: (k, j)),
                pl.BlockSpec((1, tile_n), lambda i, j, k: (0, j)),
            ],
            out_specs=pl.BlockSpec((tile_m, tile_n), lambda i, j, k: (i, j)),
            scratch_shapes=[pltpu.VMEM((tile_m, tile_n), jnp.float32)],
        )
        kernel = _conv_linear_kernel_tiled_k
        semantics = ("parallel", "parallel", "arbitrary")

    out2d = pl.pallas_call(
        kernel,
        out_shape=jax.ShapeDtypeStruct((Mp, Np), out_dtype),
        grid_spec=grid_spec,
        compiler_params=pltpu.CompilerParams(
            dimension_semantics=semantics,
            # Above the 16/32 MiB default scoped limit, below v7x's 64 MiB.
            vmem_limit_bytes=48 * 1024 * 1024,
        ),
        cost_estimate=cost,
    )(x2d, w, b2d)

    out = out2d[:M, :N].reshape(B, S, N)
    if not channel_last:
        out = jnp.swapaxes(out, 1, 2)  # -> (B, N, S)
    return out


def init_conv_linear_params(key, in_features, out_features):
    """Deterministic init matching Conv1d(in, out, kernel_size=1) shapes.

    PyTorch Conv1d weight shape is (out, in, 1); we squeeze the kernel dim.
    Uses uniform(-1/sqrt(in), 1/sqrt(in)) like PyTorch's default init.
    """
    kw, kb = jax.random.split(key)
    bound = 1.0 / jnp.sqrt(jnp.float32(in_features))
    weight = jax.random.uniform(
        kw, (out_features, in_features), jnp.float32, -bound, bound)
    bias = jax.random.uniform(
        kb, (out_features,), jnp.float32, -bound, bound)
    return weight, bias


if __name__ == "__main__":
    key = jax.random.PRNGKey(0)
    k_x, k_p, k_x2, k_p2 = jax.random.split(key, 4)

    # Small shapes consistent with ConvLinear(channel_last=True).
    batch, seq_len, in_features, out_features = 2, 8, 32, 64
    x = jax.random.normal(k_x, (batch, seq_len, in_features), jnp.float32)
    weight, bias = init_conv_linear_params(k_p, in_features, out_features)

    ref = jnp.einsum("bsk,nk->bsn", x, weight) + bias[None, None, :]

    # fp32 path (channel_last=True).
    out = jax.block_until_ready(conv_linear(x, weight, bias))
    assert out.shape == (batch, seq_len, out_features)
    assert jnp.allclose(out, ref, atol=1e-5, rtol=1e-5)

    # channel_last=False path: x is (B, K, S), output is (B, N, S).
    x_cf = jnp.swapaxes(x, 1, 2)
    out_cf = jax.block_until_ready(
        conv_linear(x_cf, weight, bias, channel_last=False))
    assert out_cf.shape == (batch, out_features, seq_len)
    assert jnp.allclose(jnp.swapaxes(out_cf, 1, 2), ref, atol=1e-5, rtol=1e-5)

    # bf16-operand / fp32-accumulate path (MXU-rate dtype on v6e/v7x).
    out_bf16 = jax.block_until_ready(
        conv_linear(x, weight, bias, compute_dtype=jnp.bfloat16))
    assert out_bf16.shape == (batch, seq_len, out_features)
    assert jnp.allclose(out_bf16, ref, atol=5e-2, rtol=5e-2)

    # Multi-tile / padded-shape check: exercises the M and N grid axes plus
    # 128-lane zero-padding of K and N and the M-row padding slice.
    b2, s2, k2, n2 = 4, 192, 96, 200
    x2 = jax.random.normal(k_x2, (b2, s2, k2), jnp.float32)
    w2, bias2 = init_conv_linear_params(k_p2, k2, n2)
    ref2 = jnp.einsum("bsk,nk->bsn", x2, w2) + bias2[None, None, :]
    out2 = jax.block_until_ready(conv_linear(x2, w2, bias2))
    assert out2.shape == (b2, s2, n2)
    assert jnp.allclose(out2, ref2, atol=1e-4, rtol=1e-4)

    # K-tiled (accumulator) path: force a small tile_k so grid_k > 1.
    out3 = jax.block_until_ready(conv_linear(x2, w2, bias2, tile_k=128))
    assert out3.shape == (b2, s2, n2)
    assert jnp.allclose(out3, ref2, atol=1e-4, rtol=1e-4)

    print("KERNEL_OK")
</pallas_src>

<mosaic_0001>
module attributes {stable_mosaic.version = 11 : i64} {
  func.func @_conv_linear_kernel_single_k(%arg0: i32, %arg1: i32, %arg2: memref<16x128xf32, #tpu.memory_space<vmem>>, %arg3: memref<128x128xf32, #tpu.memory_space<vmem>>, %arg4: memref<1x128xf32, #tpu.memory_space<vmem>>, %arg5: memref<16x128xf32, #tpu.memory_space<vmem>>) attributes {dimension_semantics = [#tpu.dimension_semantics<parallel>, #tpu.dimension_semantics<parallel>], iteration_bounds = array<i64: 1, 1>, scalar_prefetch = 0 : i64, scratch_operands = 0 : i64, tpu.core_type = #tpu.core_type<tc>, window_params = [{transform_indices = @transform_0, window_bounds = array<i64: 16, 128>}, {transform_indices = @transform_1, window_bounds = array<i64: 128, 128>}, {transform_indices = @transform_2, window_bounds = array<i64: 1, 128>}, {transform_indices = @transform_3, window_bounds = array<i64: 16, 128>}]} {
    %c0 = arith.constant 0 : index
    %c0_0 = arith.constant 0 : index
    %0 = vector.load %arg2[%c0, %c0_0] : memref<16x128xf32, #tpu.memory_space<vmem>>, vector<16x128xf32>
    %c0_1 = arith.constant 0 : index
    %c0_2 = arith.constant 0 : index
    %1 = vector.load %arg3[%c0_1, %c0_2] : memref<128x128xf32, #tpu.memory_space<vmem>>, vector<128x128xf32>
    %cst = arith.constant dense<0.000000e+00> : vector<16x128xf32>
    %2 = tpu.matmul %0, %1, %cst {dimension_numbers = #tpu.dot_dimension_numbers<[1], [0], [0], [1], [0, 0, 1, 1], [], []>} : vector<16x128xf32>, vector<128x128xf32>, vector<16x128xf32> -> vector<16x128xf32>
    %c0_3 = arith.constant 0 : index
    %c0_4 = arith.constant 0 : index
    %3 = vector.load %arg4[%c0_3, %c0_4] : memref<1x128xf32, #tpu.memory_space<vmem>>, vector<1x128xf32>
    %4 = vector.broadcast %3 : vector<1x128xf32> to vector<16x128xf32>
    %5 = arith.addf %2, %4 : vector<16x128xf32>
    %c0_5 = arith.constant 0 : index
    %c0_6 = arith.constant 0 : index
    %6 = vector.load %arg5[%c0_5, %c0_6] : memref<16x128xf32, #tpu.memory_space<vmem>>, vector<16x128xf32>
    tpu.vector_store %arg5[%c0_5, %c0_6], %5 {strides = array<i32>} : memref<16x128xf32, #tpu.memory_space<vmem>>, vector<16x128xf32>,
    return
  }
  func.func @transform_0(%arg0: i32, %arg1: i32) -> (i32, i32) {
    %c0_i32 = arith.constant 0 : i32
    %c0_i32_0 = arith.constant 0 : i32
    return %arg0, %c0_i32 : i32, i32
  }
  func.func @transform_1(%arg0: i32, %arg1: i32) -> (i32, i32) {
    %c0_i32 = arith.constant 0 : i32
    %c0_i32_0 = arith.constant 0 : i32
    return %c0_i32, %arg1 : i32, i32
  }
  func.func @transform_2(%arg0: i32, %arg1: i32) -> (i32, i32) {
    %c0_i32 = arith.constant 0 : i32
    %c0_i32_0 = arith.constant 0 : i32
    return %c0_i32, %arg1 : i32, i32
  }
  func.func @transform_3(%arg0: i32, %arg1: i32) -> (i32, i32) {
    %c0_i32 = arith.constant 0 : i32
    return %arg0, %arg1 : i32, i32
  }
}

</mosaic_0001>

<llo_original>
// kernel: tpu_custom_call.1
$region0: #{tpu_custom_call.1}
  #allocation0 [shape = 'u32[]', space=smem, size = 0x4, offset = 0x4, fixed_abs, tag = 'smem constant byte address 0x4 - core index']
  #allocation1 [shape = 'u32[144,128]{1,0:T(1,128)}', space=vmem, size = 0x12000, scoped, tag = 'internal scratch']
  %s0 = inlined_call_operand.hbm [shape: f32[16,128], index: 0, kind: input, shape index: {}]
  %s1 = inlined_call_operand.hbm [shape: f32[128,128], index: 1, kind: input, shape index: {}]
  %s2 = inlined_call_operand.vmem [shape: f32[1,128], index: 2, kind: input, shape index: {}]
  %s3 = inlined_call_operand.hbm [shape: f32[16,128], index: 3, kind: output, shape index: {}]
  %s4 = sld [smem:[#allocation0]]
  $region30: #{tpu_custom_call.1} parent=0
    _
  %s6 = ssub.s32 1, %s4
  %s7 = scalar_select 0, %s6, %s4
  $region1: #{tpu_custom_call.1} parent=0
    #allocation2 [shape = 'u8[8192]{0}', space=vmem, size = 0x2000, scoped, tag = 'input window, operand 0, single buffered']
    #allocation3 [shape = 's32[1]{0}', space=sflag, size = 0x4, scoped, tag = 'scoped memory for tpu_custom_call.1']
    #allocation4 [shape = 's32[1]{0}', space=sflag, size = 0x4, scoped, tag = 'scoped memory for tpu_custom_call.1']
    #allocation5 [shape = 'u8[65536]{0}', space=vmem, size = 0x10000, scoped, tag = 'input window, operand 1, single buffered']
    #allocation6 [shape = 's32[1]{0}', space=sflag, size = 0x4, scoped, tag = 'scoped memory for tpu_custom_call.1']
    #allocation7 [shape = 'u8[8192]{0}', space=vmem, size = 0x2000, scoped, tag = 'output window, operand 0, single buffered']
    %8 = vsyncpa [#allocation3], 0
    %9 = vsyncpa [#allocation6], 0
    %10 = vsyncpa [#allocation4], 0
    // Predicated region
    $region2: #{tpu_custom_call.1} parent=1 // pred_check
      _
    $region3: #{tpu_custom_call.1} parent=1 // pred_check_branch
      %12 = sbr.rel (0) target = $region5
    $region4: #{tpu_custom_call.1} parent=1 // pred_region
      %s14 = ssub.s32 256, 256
      %15 = vsyncadd [#allocation3], %s14
      %s16 = sshll.u32 [#allocation2], 4
      %s17 = int_to_ptr.vmem [resolvable:$true] %s16
      %22 = dma.hbm_to_vmem [thread:$0]  %s0, 256, %s17, [#allocation3], 128, 128, 8
    $region5: #{tpu_custom_call.1} parent=1 // pred_fallthru
      _
    // Predicated region
    $region6: #{tpu_custom_call.1} parent=1 // pred_check
      _
    $region7: #{tpu_custom_call.1} parent=1 // pred_check_branch
      %24 = sbr.rel (0) target = $region9
    $region8: #{tpu_custom_call.1} parent=1 // pred_region
      %s26 = ssub.s32 2048, 2048
      %27 = vsyncadd [#allocation6], %s26
      %s28 = sshll.u32 [#allocation5], 4
      %s29 = int_to_ptr.vmem [resolvable:$true] %s28
      %34 = dma.hbm_to_vmem [thread:$0]  %s1, 2048, %s29, [#allocation6], 128, 128, 8
    $region9: #{tpu_custom_call.1} parent=1 // pred_fallthru
      _
    // Predicated region
    $region10: #{tpu_custom_call.1} parent=1 // pred_check
      _
    $region11: #{tpu_custom_call.1} parent=1 // pred_check_branch
      %36 = sbr.rel (0) target = $region13
    $region12: #{tpu_custom_call.1} parent=1 // pred_region
      _
    $region13: #{tpu_custom_call.1} parent=1 // pred_fallthru
      _
    // Predicated region
    $region14: #{tpu_custom_call.1} parent=1 // pred_check
      _
    $region15: #{tpu_custom_call.1} parent=1 // pred_check_branch
      %38 = sbr.rel (0) target = $region17
    $region16: #{tpu_custom_call.1} parent=1 // pred_region
      %39 = dma.done [#allocation3], 256
    $region17: #{tpu_custom_call.1} parent=1 // pred_fallthru
      _
    // Predicated region
    $region18: #{tpu_custom_call.1} parent=1 // pred_check
      _
    $region19: #{tpu_custom_call.1} parent=1 // pred_check_branch
      %41 = sbr.rel (0) target = $region21
    $region20: #{tpu_custom_call.1} parent=1 // pred_region
      %42 = dma.done [#allocation6], 2048
    $region21: #{tpu_custom_call.1} parent=1 // pred_fallthru
      _
    %v43 = vld [vmem:[#allocation2] sm:$0xff]
    %v44 = vld [vmem:[#allocation2 + $0x8] sm:$0xff]
    %v45 = vld [vmem:[#allocation5] sm:$0xff]
    %v46 = vld [vmem:[#allocation5 + $0x8] sm:$0xff]
    %v47 = vld [vmem:[#allocation5 + $0x10] sm:$0xff]
    %v48 = vld [vmem:[#allocation5 + $0x18] sm:$0xff]
    %v49 = vld [vmem:[#allocation5 + $0x20] sm:$0xff]
    %v50 = vld [vmem:[#allocation5 + $0x28] sm:$0xff]
    %v51 = vld [vmem:[#allocation5 + $0x30] sm:$0xff]
    %v52 = vld [vmem:[#allocation5 + $0x38] sm:$0xff]
    %v53 = vld [vmem:[#allocation5 + $0x40] sm:$0xff]
    %v54 = vld [vmem:[#allocation5 + $0x48] sm:$0xff]
    %v55 = vld [vmem:[#allocation5 + $0x50] sm:$0xff]
    %v56 = vld [vmem:[#allocation5 + $0x58] sm:$0xff]
    %v57 = vld [vmem:[#allocation5 + $0x60] sm:$0xff]
    %v58 = vld [vmem:[#allocation5 + $0x68] sm:$0xff]
    %v59 = vld [vmem:[#allocation5 + $0x70] sm:$0xff]
    %v60 = vld [vmem:[#allocation5 + $0x78] sm:$0xff]
    %v61 = vld [vmem:[%s2] sm:$0x1]
    %v63 = vlaneseq
    %v64 = vshrl.u32 %v63, 7
    %v65 = vsub.s32 0, %v64
    %v66 = vrot.slane %v61, %v65
    %68 = vmatprep.subr.mxu0 0.0
    %69 = vmatpush1.msra.mxu0 %v45
    %70 = vmatprep.subr.mxu0 0.0
    %71 = vmatpush1.msra.mxu0 %v46
    %72 = vmatprep.subr.mxu0 0.0
    %73 = vmatpush1.msra.mxu0 %v47
    %74 = vmatprep.subr.mxu0 0.0
    %75 = vmatpush1.msra.mxu0 %v48
    %76 = vmatprep.subr.mxu0 0.0
    %77 = vmatpush1.msra.mxu0 %v49
    %78 = vmatprep.subr.mxu0 0.0
    %79 = vmatpush1.msra.mxu0 %v50
    %80 = vmatprep.subr.mxu0 0.0
    %81 = vmatpush1.msra.mxu0 %v51
    %82 = vmatprep.subr.mxu0 0.0
    %83 = vmatpush1.msra.mxu0 %v52
    %84 = vmatprep.subr.mxu0 0.0
    %85 = vmatpush1.msra.mxu0 %v53
    %86 = vmatprep.subr.mxu0 0.0
    %87 = vmatpush1.msra.mxu0 %v54
    %88 = vmatprep.subr.mxu0 0.0
    %89 = vmatpush1.msra.mxu0 %v55
    %90 = vmatprep.subr.mxu0 0.0
    %91 = vmatpush1.msra.mxu0 %v56
    %92 = vmatprep.subr.mxu0 0.0
    %93 = vmatpush1.msra.mxu0 %v57
    %94 = vmatprep.subr.mxu0 0.0
    %95 = vmatpush1.msra.mxu0 %v58
    %96 = vmatprep.subr.mxu0 0.0
    %97 = vmatpush1.msra.mxu0 %v59
    %98 = vmatprep.subr.mxu0 0.0
    %99 = vmatpush1.msra.mxu0 %v60
    %100 = vmatprep.subr.mxu0 0.0
    %101 = vmatpush1.msra.mxu0 0.0
    %102 = vmatprep.subr.mxu0 0.0
    %103 = vmatpush1.msra.mxu0 0.0
    %104 = vmatprep.subr.mxu0 0.0
    %105 = vmatpush1.msra.mxu0 0.0
    %106 = vmatprep.subr.mxu0 0.0
    %107 = vmatpush1.msra.mxu0 0.0
    %108 = vmatprep.subr.mxu0 0.0
    %109 = vmatpush1.msra.mxu0 0.0
    %110 = vmatprep.subr.mxu0 0.0
    %111 = vmatpush1.msra.mxu0 0.0
    %112 = vmatprep.subr.mxu0 0.0
    %113 = vmatpush1.msra.mxu0 0.0
    %114 = vmatprep.subr.mxu0 0.0
    %115 = vmatpush1.msra.mxu0 0.0
    %116 = vmatprep.subr.mxu0 0.0
    %117 = vmatpush1.msra.mxu0 0.0
    %118 = vmatprep.subr.mxu0 0.0
    %119 = vmatpush1.msra.mxu0 0.0
    %120 = vmatprep.subr.mxu0 0.0
    %121 = vmatpush1.msra.mxu0 0.0
    %122 = vmatprep.subr.mxu0 0.0
    %123 = vmatpush1.msra.mxu0 0.0
    %124 = vmatprep.subr.mxu0 0.0
    %125 = vmatpush1.msra.mxu0 0.0
    %126 = vmatprep.subr.mxu0 0.0
    %127 = vmatpush1.msra.mxu0 0.0
    %128 = vmatprep.subr.mxu0 0.0
    %129 = vmatpush1.msra.mxu0 0.0
    %130 = vmatprep.subr.mxu0 0.0
    %131 = vmatpush1.msra.mxu0 0.0
    %132 = vmatprep.mubr.f32.mxu0 0.0
    %133 = vmatmul.mubr.f32.gmra.mrb[0].mxu0 %v43
    %v134 = vpop.f32.mrb[0].mxu0
    %v135 = vadd.f32 %v66, %v134
    %v136 = vpop.f32.mrb[0].mxu0
    %137 = vmatprep.mubr.f32.mxu0 0.0
    %138 = vmatmul.mubr.f32.gmra.mrb[0].mxu0 %v44
    %v139 = vpop.f32.mrb[0].mxu0
    %v140 = vadd.f32 %v66, %v139
    %v141 = vpop.f32.mrb[0].mxu0
    %142 = vdwg.mxu0
    %143 = vst [vmem:[#allocation7] sm:$0xff] %v135
    %144 = vst [vmem:[#allocation7 + $0x8] sm:$0xff] %v140
    // Predicated region
    $region22: #{tpu_custom_call.1} parent=1 // pred_check
      _
    $region23: #{tpu_custom_call.1} parent=1 // pred_check_branch
      %146 = sbr.rel (0) target = $region25
    $region24: #{tpu_custom_call.1} parent=1 // pred_region
      %s148 = ssub.s32 256, 256
      %149 = vsyncadd [#allocation4], %s148
      %s150 = sshll.u32 [#allocation7], 4
      %s151 = int_to_ptr.vmem [resolvable:$true] %s150
      %156 = dma.vmem_to_hbm [thread:$0]  %s151, 256, %s3, [#allocation4], 128, 128, 8
    $region25: #{tpu_custom_call.1} parent=1 // pred_fallthru
      _
    // Predicated region
    $region26: #{tpu_custom_call.1} parent=1 // pred_check
      _
    $region27: #{tpu_custom_call.1} parent=1 // pred_check_branch
      %158 = sbr.rel (0) target = $region29
    $region28: #{tpu_custom_call.1} parent=1 // pred_region
      %159 = dma.done [#allocation4], 256
    $region29: #{tpu_custom_call.1} parent=1 // pred_fallthru
      _
    %160 = vsyncpa [#allocation3], 1
    %161 = vsyncpa [#allocation6], 1
    %162 = vsyncpa [#allocation4], 1

</llo_original>
